<compile_context>
chip_gen: v6e
topology: v6e:2x2x1
jax: 0.10.0
libtpu: 0.0.40
codegen_flags: <defaults>
</compile_context>

<pallas_src>
import jax
import jax.numpy as jnp
from jax import lax
from jax.experimental import pallas as pl
from jax.experimental.pallas import tpu as pltpu


def _disc_kernel_vpu(x_ref, w_ref, b_ref, o_ref):
    """output_dim == 1 fast path: VPU multiply + lane reduce, no MXU.

    x: (B, 24), w: (1, 24), b: (1, 1)  ->  o: (B, 1) = sigmoid(x @ w.T + b)
    """
    logits = jnp.sum(x_ref[...] * w_ref[...], axis=-1, keepdims=True) + b_ref[...]
    o_ref[...] = jax.nn.sigmoid(logits).astype(o_ref.dtype)


def _disc_kernel_mxu(x_ref, w_ref, b_ref, o_ref):
    """General output_dim: one MXU pass, contracting the shared 24-dim.

    Weight stays in its native (O, 24) layout (no wrapper transpose HLO).
    x: (B, 24), w: (O, 24), b: (1, O)  ->  o: (B, O) = sigmoid(x @ w.T + b)
    """
    logits = lax.dot_general(
        x_ref[...], w_ref[...],
        dimension_numbers=(((1,), (1,)), ((), ())),   # contract dim 1 of both
        preferred_element_type=jnp.float32,
        precision=lax.Precision.HIGHEST,
    ) + b_ref[...]
    o_ref[...] = jax.nn.sigmoid(logits).astype(o_ref.dtype)


def discriminator_forward(x, w, b):
    """Matches Discriminator.forward: sigmoid(Linear(24->O)(input.reshape(2, 24))).

    x: any array with 48 elements (reshaped to (2, 24) per the module spec).
    w: (O, 24) Linear weight (native PyTorch layout), b: (O,) Linear bias.
    Returns (2, O) float32.
    """
    # input.reshape(2, 24); the subsequent view(-1, 24) in the module is a no-op.
    x2 = jnp.reshape(x, (2, 24)).astype(jnp.float32)
    B, _ = x2.shape
    O = w.shape[0]

    w2 = jnp.asarray(w, jnp.float32)                    # (O, 24), native layout
    b2 = jnp.reshape(b, (1, O)).astype(jnp.float32)     # (1, O)

    vmem = pl.BlockSpec(memory_space=pltpu.MemorySpace.VMEM)
    kernel = _disc_kernel_vpu if O == 1 else _disc_kernel_mxu

    # No grid (problem is a single vreg's worth of work), no padding, no
    # CostEstimate: everything resident in VMEM, one kernel invocation.
    return pl.pallas_call(
        kernel,
        out_shape=jax.ShapeDtypeStruct((B, O), jnp.float32),
        in_specs=[vmem, vmem, vmem],
        out_specs=vmem,
    )(x2, w2, b2)


def discriminator_reference(x, w, b):
    """Plain-JAX reference matching the PyTorch module."""
    x2 = jnp.reshape(x, (2, 24)).astype(jnp.float32)
    logits = jnp.dot(x2, jnp.transpose(w).astype(jnp.float32),
                     precision=lax.Precision.HIGHEST) + jnp.reshape(b, (1, -1))
    return jax.nn.sigmoid(logits)


def init_params(key, output_dim=1):
    # initialize_weights: Linear weight ~ N(0, 0.02), bias = 0.
    w = 0.02 * jax.random.normal(key, (output_dim, 24), jnp.float32)
    b = jnp.zeros((output_dim,), jnp.float32)
    return w, b


if __name__ == "__main__":
    OUTPUT_DIM = 1  # module default

    key = jax.random.PRNGKey(0)
    k_x, k_w = jax.random.split(key)
    x = jax.random.normal(k_x, (2, 24), jnp.float32)   # 48 elements, as forward expects
    w, b = init_params(k_w, OUTPUT_DIM)

    out = jax.block_until_ready(discriminator_forward(x, w, b))
    ref = jax.block_until_ready(discriminator_reference(x, w, b))

    assert out.shape == (2, OUTPUT_DIM), out.shape
    assert jnp.allclose(out, ref, atol=1e-6, rtol=1e-6), float(jnp.max(jnp.abs(out - ref)))
    print("KERNEL_OK")
</pallas_src>

<mosaic_0001>
module attributes {stable_mosaic.version = 11 : i64} {
  func.func @_disc_kernel_vpu(%arg0: memref<2x24xf32, #tpu.memory_space<vmem>>, %arg1: memref<1x24xf32, #tpu.memory_space<vmem>>, %arg2: memref<1x1xf32, #tpu.memory_space<vmem>>, %arg3: memref<2x1xf32, #tpu.memory_space<vmem>>) attributes {dimension_semantics = [], scalar_prefetch = 0 : i64, scratch_operands = 0 : i64, tpu.core_type = #tpu.core_type<tc>} {
    %c0 = arith.constant 0 : index
    %c0_0 = arith.constant 0 : index
    %0 = vector.load %arg0[%c0, %c0_0] : memref<2x24xf32, #tpu.memory_space<vmem>>, vector<2x24xf32>
    %c0_1 = arith.constant 0 : index
    %c0_2 = arith.constant 0 : index
    %1 = vector.load %arg1[%c0_1, %c0_2] : memref<1x24xf32, #tpu.memory_space<vmem>>, vector<1x24xf32>
    %2 = vector.broadcast %1 : vector<1x24xf32> to vector<2x24xf32>
    %3 = arith.mulf %0, %2 : vector<2x24xf32>
    %cst = arith.constant dense<0.000000e+00> : vector<2xf32>
    %4 = vector.multi_reduction <add>, %3, %cst [1] : vector<2x24xf32> to vector<2xf32>
    %5 = vector.shape_cast %4 : vector<2xf32> to vector<2x1xf32>
    %c0_3 = arith.constant 0 : index
    %c0_4 = arith.constant 0 : index
    %6 = vector.load %arg2[%c0_3, %c0_4] : memref<1x1xf32, #tpu.memory_space<vmem>>, vector<1x1xf32>
    %7 = vector.broadcast %6 : vector<1x1xf32> to vector<2x1xf32>
    %8 = arith.addf %5, %7 : vector<2x1xf32>
    %9 = arith.negf %8 : vector<2x1xf32>
    %10 = math.exp %9 : vector<2x1xf32>
    %cst_5 = arith.constant 1.000000e+00 : f32
    %11 = vector.broadcast %cst_5 : f32 to vector<2x1xf32>
    %12 = arith.addf %11, %10 : vector<2x1xf32>
    %13 = arith.divf %11, %12 : vector<2x1xf32>
    %c0_6 = arith.constant 0 : index
    %c0_7 = arith.constant 0 : index
    %14 = vector.load %arg3[%c0_6, %c0_7] : memref<2x1xf32, #tpu.memory_space<vmem>>, vector<2x1xf32>
    tpu.vector_store %arg3[%c0_6, %c0_7], %13 {strides = array<i32>} : memref<2x1xf32, #tpu.memory_space<vmem>>, vector<2x1xf32>,
    return
  }
}

</mosaic_0001>

<llo_original>
// kernel: tpu_custom_call.1
$region0: #{tpu_custom_call.1}
  #allocation0 [shape = 'u32[]', space=smem, size = 0x4, offset = 0x4, fixed_abs, tag = 'smem constant byte address 0x4 - core index']
  #allocation1 [shape = 'u32[144,128]{1,0:T(1,128)}', space=vmem, size = 0x12000, scoped, tag = 'internal scratch']
  #allocation2 [shape = 'f32[1,1]{1,0:T(1,128)S(1)}', space=vmem, size = 0x200, scoped, tag = 'scoped memory for tpu_custom_call.1']
  %s0 = inlined_call_operand.vmem [shape: f32[2,24], index: 0, kind: input, shape index: {}]
  %s1 = inlined_call_operand.vmem [shape: f32[1,24], index: 1, kind: input, shape index: {}]
  %s2 = inlined_call_operand.<no memory space> [shape: f32[1,1], index: 2, kind: input, shape index: {}]
  %s3 = inlined_call_operand.vmem [shape: f32[2,1], index: 3, kind: output, shape index: {}]
  %s4 = sld [smem:[#allocation0]]
  $region22: #{tpu_custom_call.1} parent=0
    _
  %s6 = ssub.s32 1, %s4
  %s7 = scalar_select 0, %s6, %s4
  %v8 = vstv %s2
  %9 = vst [vmem:[#allocation2] sm:$0x1] %v8
  // Predicated region
  $region2: #{tpu_custom_call.1} parent=0 // pred_check
    _
  $region3: #{tpu_custom_call.1} parent=0 // pred_check_branch
    %11 = sbr.rel (0) target = $region5
  $region4: #{tpu_custom_call.1} parent=0 // pred_region
    _
  $region5: #{tpu_custom_call.1} parent=0 // pred_fallthru
    _
  // Predicated region
  $region6: #{tpu_custom_call.1} parent=0 // pred_check
    _
  $region7: #{tpu_custom_call.1} parent=0 // pred_check_branch
    %13 = sbr.rel (0) target = $region9
  $region8: #{tpu_custom_call.1} parent=0 // pred_region
    _
  $region9: #{tpu_custom_call.1} parent=0 // pred_fallthru
    _
  // Predicated region
  $region10: #{tpu_custom_call.1} parent=0 // pred_check
    _
  $region11: #{tpu_custom_call.1} parent=0 // pred_check_branch
    %15 = sbr.rel (0) target = $region13
  $region12: #{tpu_custom_call.1} parent=0 // pred_region
    _
  $region13: #{tpu_custom_call.1} parent=0 // pred_fallthru
    _
  %v16 = vld [vmem:[%s0] sm:$0x3]
  %v17 = vld [vmem:[%s1] sm:$0x1]
  %v19 = vlaneseq
  %v20 = vshrl.u32 %v19, 7
  %v21 = vsub.s32 0, %v20
  %v22 = vrot.slane %v17, %v21
  %v24 = vmul.f32 %v16, %v22
  %vm25 = vcmask 189440
  %v26 = vsel %vm25, %v24, 0.0
  %27 = vadd.xlane.f32.xlu0 %v26
  %v28 = vpop.xlane.xlu0 %27
  %v29 = vld [vmem:[#allocation2] sm:$0x1]
  %v31 = vlaneseq
  %v32 = vshrl.u32 %v31, 7
  %v33 = vsub.s32 0, %v32
  %v34 = vrot.slane %v29, %v33
  %v36 = vadd.f32 %v28, %v34
  %v37 = vxor.u32 %v36, 2147483648
  %v38 = vmul.f32 %v37, 1.442695
  %v39 = vpow.pop %v38
  %v40 = vadd.f32 %v39, 1.0
  %v41 = vrcp.pop %v40
  %v42 = vmul.f32 1.0, %v41
  %vm43 = vcmask 1024
  %44 = vst.msk [vmem:[%s3] sm:$0x3] %vm43, %v42
  // Predicated region
  $region14: #{tpu_custom_call.1} parent=0 // pred_check
    _
  $region15: #{tpu_custom_call.1} parent=0 // pred_check_branch
    %46 = sbr.rel (0) target = $region17
  $region16: #{tpu_custom_call.1} parent=0 // pred_region
    _
  $region17: #{tpu_custom_call.1} parent=0 // pred_fallthru
    _
  // Predicated region
  $region18: #{tpu_custom_call.1} parent=0 // pred_check
    _
  $region19: #{tpu_custom_call.1} parent=0 // pred_check_branch
    %48 = sbr.rel (0) target = $region21
  $region20: #{tpu_custom_call.1} parent=0 // pred_region
    _
  $region21: #{tpu_custom_call.1} parent=0 // pred_fallthru
    _

</llo_original>
